<compile_context>
chip_gen: v6e
topology: v6e:2x2x1
jax: 0.10.0
libtpu: 0.0.40
codegen_flags: <defaults>
</compile_context>

<pallas_src>
import jax
import jax.numpy as jnp
import numpy as np
from jax.experimental import pallas as pl
from jax.experimental.pallas import tpu as pltpu


# --------------------------- per-layer GCN kernel ---------------------------

def gcn_layer_kernel(a_ref, h_ref, w_ref, b_ref, out_ref, acc_ref):
    """One GCNConv layer, row-tiled:  out[i] = relu((sum_k A[i,k] @ h[k]) @ W + b)."""
    k = pl.program_id(1)

    @pl.when(k == 0)
    def _():
        acc_ref[...] = jnp.zeros_like(acc_ref)

    # aggregate: (tm, tk) bf16 @ (tk, Fin) bf16 -> f32 accumulate
    acc_ref[...] += jnp.dot(a_ref[...], h_ref[...],
                            preferred_element_type=jnp.float32)

    @pl.when(k == pl.num_programs(1) - 1)
    def _():
        z = jnp.dot(acc_ref[...].astype(jnp.bfloat16), w_ref[...],
                    preferred_element_type=jnp.float32) + b_ref[...]
        out_ref[...] = jnp.maximum(z, 0.0).astype(out_ref.dtype)


def gcn_layer(a_bf, h_in, w_bf, b_f32, *, tm, tk):
    n_pad = a_bf.shape[0]
    fin = h_in.shape[1]
    hout = w_bf.shape[1]
    grid = (n_pad // tm, n_pad // tk)

    # VMEM estimate: double-buffered A / h / out tiles + resident W, b + acc scratch.
    est = (2 * tm * tk * 2) + (2 * tk * fin * 2) + (fin * hout * 2) + hout * 4 \
        + (2 * tm * hout * 2) + tm * max(fin, 128) * 4
    vmem_limit = int(min(64 << 20, max(32 << 20, 4 * est)))

    flops = 2 * n_pad * n_pad * fin + 2 * n_pad * fin * hout
    bytes_accessed = (n_pad * n_pad * 2 + n_pad * fin * 2 + fin * hout * 2
                      + hout * 4 + n_pad * hout * 2)

    return pl.pallas_call(
        gcn_layer_kernel,
        out_shape=jax.ShapeDtypeStruct((n_pad, hout), jnp.bfloat16),
        grid_spec=pltpu.PrefetchScalarGridSpec(
            num_scalar_prefetch=0,
            grid=grid,
            in_specs=[
                pl.BlockSpec((tm, tk), lambda i, k: (i, k)),      # A row/col tile
                pl.BlockSpec((tk, fin), lambda i, k: (k, 0)),     # h k-tile
                pl.BlockSpec((fin, hout), lambda i, k: (0, 0)),   # W (resident)
                pl.BlockSpec((1, hout), lambda i, k: (0, 0)),     # b (resident)
            ],
            out_specs=pl.BlockSpec((tm, hout), lambda i, k: (i, 0)),
            scratch_shapes=[pltpu.VMEM((tm, fin), jnp.float32)],
        ),
        compiler_params=pltpu.CompilerParams(
            dimension_semantics=("parallel", "arbitrary"),
            vmem_limit_bytes=vmem_limit),
        cost_estimate=pl.CostEstimate(flops=flops, transcendentals=0,
                                      bytes_accessed=bytes_accessed),
    )(a_bf, h_in, w_bf, b_f32)


# --------------------- pooling + linear + log_softmax head -------------------

def pool_head_kernel(off_ref, cnt_ref, h_ref, wl_ref, bl_ref, out_ref, pooled_ref):
    """Segment global-max-pool over nodes per graph, then Linear + log_softmax."""
    h = h_ref[...].astype(jnp.float32)                       # (N_pad, H)
    n = h.shape[0]
    node_idx = jax.lax.broadcasted_iota(jnp.int32, (n, 1), 0)
    neg = jnp.float32(-1e30)
    num_graphs = pooled_ref.shape[0]

    def body(g, carry):
        off = off_ref[g]
        cnt = cnt_ref[g]
        member = (node_idx >= off) & (node_idx < off + cnt)   # (N_pad, 1)
        pooled_ref[pl.ds(g, 1), :] = jnp.max(
            jnp.where(member, h, neg), axis=0, keepdims=True)
        return carry

    jax.lax.fori_loop(0, num_graphs, body, 0)

    logits = jnp.dot(pooled_ref[...].astype(jnp.bfloat16), wl_ref[...],
                     preferred_element_type=jnp.float32) + bl_ref[...]  # (G, C)
    m = jnp.max(logits, axis=-1, keepdims=True)
    z = logits - m
    out_ref[...] = z - jnp.log(jnp.sum(jnp.exp(z), axis=-1, keepdims=True))


def pool_head(offsets, counts, h_final, wl_bf, bl_f32):
    n_pad, nhid = h_final.shape
    num_classes = wl_bf.shape[1]
    num_graphs = offsets.shape[0]

    est = n_pad * nhid * 2 * 2 + num_graphs * nhid * 4 + nhid * num_classes * 2 \
        + num_classes * 4 + num_graphs * num_classes * 4
    vmem_limit = int(min(64 << 20, max(32 << 20, 4 * est)))

    return pl.pallas_call(
        pool_head_kernel,
        out_shape=jax.ShapeDtypeStruct((num_graphs, num_classes), jnp.float32),
        in_specs=[
            pl.BlockSpec(memory_space=pltpu.MemorySpace.SMEM),   # graph offsets
            pl.BlockSpec(memory_space=pltpu.MemorySpace.SMEM),   # graph node counts
            pl.BlockSpec(memory_space=pltpu.MemorySpace.VMEM),   # final activations
            pl.BlockSpec(memory_space=pltpu.MemorySpace.VMEM),   # lin1 weight
            pl.BlockSpec(memory_space=pltpu.MemorySpace.VMEM),   # lin1 bias
        ],
        out_specs=pl.BlockSpec(memory_space=pltpu.MemorySpace.VMEM),
        scratch_shapes=[pltpu.VMEM((num_graphs, nhid), jnp.float32)],
        compiler_params=pltpu.CompilerParams(vmem_limit_bytes=vmem_limit),
    )(offsets, counts, h_final, wl_bf, bl_f32)


# ------------------------------- forward pass --------------------------------

def _round_up(v, m):
    return ((v + m - 1) // m) * m


def model_forward(a_hat, x, graph_offsets, graph_counts, params, *, row_tile=512):
    """graph_offsets/graph_counts: (G,) int32 contiguous node segments per graph."""
    num_nodes = a_hat.shape[0]
    bf16 = jnp.bfloat16

    # Generation-aware-ish tiling: full block for small N, 512-row tiles otherwise
    # (512 keeps double-buffered A tiles comfortably inside v7x's 64 MiB VMEM).
    if num_nodes <= row_tile:
        n_pad = _round_up(num_nodes, 16)
        tm = tk = n_pad
    else:
        n_pad = _round_up(num_nodes, row_tile)
        tm = tk = row_tile
    pad = n_pad - num_nodes

    a_bf = jnp.pad(a_hat, ((0, pad), (0, pad))).astype(bf16)      # zero rows/cols: no effect
    h = jnp.pad(x, ((0, pad), (0, 0))).astype(bf16)

    h = gcn_layer(a_bf, h, params["w1"].astype(bf16), params["b1"], tm=tm, tk=tk)
    h = gcn_layer(a_bf, h, params["w2"].astype(bf16), params["b2"], tm=tm, tk=tk)
    h = gcn_layer(a_bf, h, params["w3"].astype(bf16), params["b3"], tm=tm, tk=tk)

    return pool_head(graph_offsets, graph_counts, h,
                     params["wl"].astype(bf16), params["bl"])


# ----------------------- plain-JAX glue / setup / reference ------------------

def build_normalized_adjacency(edge_index, num_nodes):
    """Dense A_hat = D^-1/2 (A + A^T + I) D^-1/2 (GCNConv normalization)."""
    src, dst = edge_index
    a = jnp.zeros((num_nodes, num_nodes), jnp.float32)
    a = a.at[src, dst].set(1.0)
    a = a.at[dst, src].set(1.0)
    a = a + jnp.eye(num_nodes, dtype=jnp.float32)
    deg = jnp.sum(a, axis=1)
    dinv = 1.0 / jnp.sqrt(deg)
    return dinv[:, None] * a * dinv[None, :]


def init_params(key, num_features, nhid, num_classes):
    ks = jax.random.split(key, 8)
    return {
        "w1": 0.1 * jax.random.normal(ks[0], (num_features, nhid), jnp.float32),
        "b1": 0.1 * jax.random.normal(ks[1], (1, nhid), jnp.float32),
        "w2": 0.1 * jax.random.normal(ks[2], (nhid, nhid), jnp.float32),
        "b2": 0.1 * jax.random.normal(ks[3], (1, nhid), jnp.float32),
        "w3": 0.1 * jax.random.normal(ks[4], (nhid, nhid), jnp.float32),
        "b3": 0.1 * jax.random.normal(ks[5], (1, nhid), jnp.float32),
        "wl": 0.1 * jax.random.normal(ks[6], (nhid, num_classes), jnp.float32),
        "bl": 0.1 * jax.random.normal(ks[7], (1, num_classes), jnp.float32),
    }


def reference_forward(a_hat, x, batch, num_graphs, params):
    """Pure-JAX reference mirroring the kernel's bf16-matmul / f32-accumulate math."""
    bf16 = jnp.bfloat16
    a = a_hat.astype(bf16)
    h = x.astype(bf16)
    for w, b in (("w1", "b1"), ("w2", "b2"), ("w3", "b3")):
        agg = jnp.dot(a, h, preferred_element_type=jnp.float32)
        z = jnp.dot(agg.astype(bf16), params[w].astype(bf16),
                    preferred_element_type=jnp.float32) + params[b]
        h = jnp.maximum(z, 0.0).astype(bf16)
    hf = h.astype(jnp.float32)
    mask = batch[None, :] == jnp.arange(num_graphs)[:, None]          # (G, N)
    pooled = jnp.max(jnp.where(mask[:, :, None], hf[None, :, :], -1e30), axis=1)
    logits = jnp.dot(pooled.astype(bf16), params["wl"].astype(bf16),
                     preferred_element_type=jnp.float32) + params["bl"]
    return jax.nn.log_softmax(logits, axis=-1)


if __name__ == "__main__":
    key = jax.random.PRNGKey(0)

    # Small synthetic "args": num_features=4, nhid=32, agument_num(num_classes)=6
    num_features, nhid, num_classes = 4, 32, 6
    nodes_per_graph, num_graphs = 8, 2
    num_nodes = nodes_per_graph * num_graphs

    k_x, k_p = jax.random.split(key)
    x = jax.random.normal(k_x, (num_nodes, num_features), jnp.float32)

    # ring edges inside each graph of 8 nodes
    src, dst = [], []
    for g in range(num_graphs):
        base = g * nodes_per_graph
        for i in range(nodes_per_graph):
            src.append(base + i)
            dst.append(base + (i + 1) % nodes_per_graph)
    edge_index = jnp.array([src, dst], dtype=jnp.int32)

    batch = jnp.array([g for g in range(num_graphs) for _ in range(nodes_per_graph)],
                      dtype=jnp.int32)
    graph_offsets = jnp.array([g * nodes_per_graph for g in range(num_graphs)], jnp.int32)
    graph_counts = jnp.array([nodes_per_graph] * num_graphs, jnp.int32)

    a_hat = build_normalized_adjacency(edge_index, num_nodes)
    params = init_params(k_p, num_features, nhid, num_classes)

    out = model_forward(a_hat, x, graph_offsets, graph_counts, params)
    out = jax.block_until_ready(out)

    ref = reference_forward(a_hat, x, batch, num_graphs, params)
    np.testing.assert_allclose(np.asarray(out), np.asarray(ref), rtol=5e-3, atol=5e-3)

    print("KERNEL_OK")
</pallas_src>

<mosaic_0001>
module attributes {stable_mosaic.version = 11 : i64} {
  func.func @gcn_layer_kernel(%arg0: i32, %arg1: i32, %arg2: memref<16x16xbf16, #tpu.memory_space<vmem>>, %arg3: memref<16x4xbf16, #tpu.memory_space<vmem>>, %arg4: memref<4x32xbf16, #tpu.memory_space<vmem>>, %arg5: memref<1x32xf32, #tpu.memory_space<vmem>>, %arg6: memref<16x32xbf16, #tpu.memory_space<vmem>>, %arg7: memref<16x4xf32, #tpu.memory_space<vmem>>) attributes {dimension_semantics = [#tpu.dimension_semantics<parallel>, #tpu.dimension_semantics<arbitrary>], iteration_bounds = array<i64: 1, 1>, scalar_prefetch = 0 : i64, scratch_operands = 1 : i64, tpu.core_type = #tpu.core_type<tc>, window_params = [{transform_indices = @transform_0, window_bounds = array<i64: 16, 16>}, {transform_indices = @transform_1, window_bounds = array<i64: 16, 4>}, {pipeline_mode = #tpu.pipeline_mode<synchronous>, transform_indices = @transform_2, window_bounds = array<i64: 4, 32>}, {pipeline_mode = #tpu.pipeline_mode<synchronous>, transform_indices = @transform_3, window_bounds = array<i64: 1, 32>}, {transform_indices = @transform_4, window_bounds = array<i64: 16, 32>}]} {
    %c0_i32 = arith.constant 0 : i32
    %0 = arith.cmpi eq, %arg1, %c0_i32 : i32
    %1 = arith.extui %0 : i1 to i32
    %c0_i32_0 = arith.constant 0 : i32
    %2 = arith.cmpi ne, %1, %c0_i32_0 : i32
    scf.if %2 {
      %cst_10 = arith.constant 0.000000e+00 : f32
      %12 = vector.broadcast %cst_10 : f32 to vector<16x4xf32>
      %c0_11 = arith.constant 0 : index
      %c0_12 = arith.constant 0 : index
      %13 = vector.load %arg7[%c0_11, %c0_12] : memref<16x4xf32, #tpu.memory_space<vmem>>, vector<16x4xf32>
      tpu.vector_store %arg7[%c0_11, %c0_12], %12 {strides = array<i32>} : memref<16x4xf32, #tpu.memory_space<vmem>>, vector<16x4xf32>,
    } else {
    }
    %c0 = arith.constant 0 : index
    %c0_1 = arith.constant 0 : index
    %3 = vector.load %arg7[%c0, %c0_1] : memref<16x4xf32, #tpu.memory_space<vmem>>, vector<16x4xf32>
    %c0_2 = arith.constant 0 : index
    %c0_3 = arith.constant 0 : index
    %4 = vector.load %arg2[%c0_2, %c0_3] : memref<16x16xbf16, #tpu.memory_space<vmem>>, vector<16x16xbf16>
    %c0_4 = arith.constant 0 : index
    %c0_5 = arith.constant 0 : index
    %5 = vector.load %arg3[%c0_4, %c0_5] : memref<16x4xbf16, #tpu.memory_space<vmem>>, vector<16x4xbf16>
    %cst = arith.constant dense<0.000000e+00> : vector<16x4xf32>
    %6 = tpu.matmul %4, %5, %cst {dimension_numbers = #tpu.dot_dimension_numbers<[1], [0], [0], [1], [0, 0, 1, 1], [], []>} : vector<16x16xbf16>, vector<16x4xbf16>, vector<16x4xf32> -> vector<16x4xf32>
    %7 = arith.addf %3, %6 : vector<16x4xf32>
    %c0_6 = arith.constant 0 : index
    %c0_7 = arith.constant 0 : index
    %8 = vector.load %arg7[%c0_6, %c0_7] : memref<16x4xf32, #tpu.memory_space<vmem>>, vector<16x4xf32>
    tpu.vector_store %arg7[%c0_6, %c0_7], %7 {strides = array<i32>} : memref<16x4xf32, #tpu.memory_space<vmem>>, vector<16x4xf32>,
    %c0_i32_8 = arith.constant 0 : i32
    %9 = arith.cmpi eq, %arg1, %c0_i32_8 : i32
    %10 = arith.extui %9 : i1 to i32
    %c0_i32_9 = arith.constant 0 : i32
    %11 = arith.cmpi ne, %10, %c0_i32_9 : i32
    scf.if %11 {
      %c0_10 = arith.constant 0 : index
      %c0_11 = arith.constant 0 : index
      %12 = vector.load %arg7[%c0_10, %c0_11] : memref<16x4xf32, #tpu.memory_space<vmem>>, vector<16x4xf32>
      %13 = arith.truncf %12 : vector<16x4xf32> to vector<16x4xbf16>
      %c0_12 = arith.constant 0 : index
      %c0_13 = arith.constant 0 : index
      %14 = vector.load %arg4[%c0_12, %c0_13] : memref<4x32xbf16, #tpu.memory_space<vmem>>, vector<4x32xbf16>
      %cst_14 = arith.constant dense<0.000000e+00> : vector<16x32xf32>
      %15 = tpu.matmul %13, %14, %cst_14 {dimension_numbers = #tpu.dot_dimension_numbers<[1], [0], [0], [1], [0, 0, 1, 1], [], []>} : vector<16x4xbf16>, vector<4x32xbf16>, vector<16x32xf32> -> vector<16x32xf32>
      %c0_15 = arith.constant 0 : index
      %c0_16 = arith.constant 0 : index
      %16 = vector.load %arg5[%c0_15, %c0_16] : memref<1x32xf32, #tpu.memory_space<vmem>>, vector<1x32xf32>
      %17 = vector.broadcast %16 : vector<1x32xf32> to vector<16x32xf32>
      %18 = arith.addf %15, %17 : vector<16x32xf32>
      %cst_17 = arith.constant 0.000000e+00 : f32
      %19 = vector.broadcast %cst_17 : f32 to vector<16x32xf32>
      %20 = arith.maximumf %18, %19 : vector<16x32xf32>
      %21 = arith.truncf %20 : vector<16x32xf32> to vector<16x32xbf16>
      %c0_18 = arith.constant 0 : index
      %c0_19 = arith.constant 0 : index
      %22 = vector.load %arg6[%c0_18, %c0_19] : memref<16x32xbf16, #tpu.memory_space<vmem>>, vector<16x32xbf16>
      tpu.vector_store %arg6[%c0_18, %c0_19], %21 {strides = array<i32>} : memref<16x32xbf16, #tpu.memory_space<vmem>>, vector<16x32xbf16>,
    } else {
    }
    return
  }
  func.func @transform_0(%arg0: i32, %arg1: i32) -> (i32, i32) {
    %c0_i32 = arith.constant 0 : i32
    return %arg0, %arg1 : i32, i32
  }
  func.func @transform_1(%arg0: i32, %arg1: i32) -> (i32, i32) {
    %c0_i32 = arith.constant 0 : i32
    %c0_i32_0 = arith.constant 0 : i32
    return %arg1, %c0_i32 : i32, i32
  }
  func.func @transform_2(%arg0: i32, %arg1: i32) -> (i32, i32) {
    %c0_i32 = arith.constant 0 : i32
    %c0_i32_0 = arith.constant 0 : i32
    %c0_i32_1 = arith.constant 0 : i32
    return %c0_i32, %c0_i32_0 : i32, i32
  }
  func.func @transform_3(%arg0: i32, %arg1: i32) -> (i32, i32) {
    %c0_i32 = arith.constant 0 : i32
    %c0_i32_0 = arith.constant 0 : i32
    %c0_i32_1 = arith.constant 0 : i32
    return %c0_i32, %c0_i32_0 : i32, i32
  }
  func.func @transform_4(%arg0: i32, %arg1: i32) -> (i32, i32) {
    %c0_i32 = arith.constant 0 : i32
    %c0_i32_0 = arith.constant 0 : i32
    return %arg0, %c0_i32 : i32, i32
  }
}

</mosaic_0001>

<llo_original>
// kernel: tpu_custom_call.1
$region0: #{tpu_custom_call.1}
  #allocation0 [shape = 'u32[]', space=smem, size = 0x4, offset = 0x4, fixed_abs, tag = 'smem constant byte address 0x4 - core index']
  #allocation1 [shape = 'u32[144,128]{1,0:T(1,128)}', space=vmem, size = 0x12000, scoped, tag = 'internal scratch']
  #allocation2 [shape = 'f32[16,4]{1,0:T(8,128)}', space=vmem, size = 0x2000, scoped, tag = 'scratch operand']
  %s0 = inlined_call_operand.vmem [shape: bf16[16,16], index: 0, kind: input, shape index: {}]
  %s1 = inlined_call_operand.vmem [shape: bf16[16,4], index: 1, kind: input, shape index: {}]
  %s2 = inlined_call_operand.vmem [shape: bf16[4,32], index: 2, kind: input, shape index: {}]
  %s3 = inlined_call_operand.vmem [shape: f32[1,32], index: 3, kind: input, shape index: {}]
  %s4 = inlined_call_operand.hbm [shape: bf16[16,32], index: 4, kind: output, shape index: {}]
  %s5 = sld [smem:[#allocation0]]
  $region34: #{tpu_custom_call.1} parent=0
    _
  %s7 = ssub.s32 1, %s5
  %s8 = scalar_select 0, %s7, %s5
  $region1: #{tpu_custom_call.1} parent=0
    #allocation3 [shape = 'u8[4096]{0}', space=vmem, size = 0x1000, scoped, tag = 'output window, operand 0, single buffered']
    #allocation4 [shape = 's32[1]{0}', space=sflag, size = 0x4, scoped, tag = 'scoped memory for tpu_custom_call.1']
    %9 = vsyncpa [#allocation4], 0
    // Predicated region
    $region2: #{tpu_custom_call.1} parent=1 // pred_check
      _
    $region3: #{tpu_custom_call.1} parent=1 // pred_check_branch
      %11 = sbr.rel (0) target = $region5
    $region4: #{tpu_custom_call.1} parent=1 // pred_region
      _
    $region5: #{tpu_custom_call.1} parent=1 // pred_fallthru
      _
    // Predicated region
    $region6: #{tpu_custom_call.1} parent=1 // pred_check
      _
    $region7: #{tpu_custom_call.1} parent=1 // pred_check_branch
      %13 = sbr.rel (0) target = $region9
    $region8: #{tpu_custom_call.1} parent=1 // pred_region
      _
    $region9: #{tpu_custom_call.1} parent=1 // pred_fallthru
      _
    // Predicated region
    $region10: #{tpu_custom_call.1} parent=1 // pred_check
      _
    $region11: #{tpu_custom_call.1} parent=1 // pred_check_branch
      %15 = sbr.rel (0) target = $region13
    $region12: #{tpu_custom_call.1} parent=1 // pred_region
      _
    $region13: #{tpu_custom_call.1} parent=1 // pred_fallthru
      _
    // Predicated region
    $region14: #{tpu_custom_call.1} parent=1 // pred_check
      _
    $region15: #{tpu_custom_call.1} parent=1 // pred_check_branch
      %17 = sbr.rel (0) target = $region17
    $region16: #{tpu_custom_call.1} parent=1 // pred_region
      _
    $region17: #{tpu_custom_call.1} parent=1 // pred_fallthru
      _
    %p19 = scmp.eq.s32.totalorder 0, 0
    // Predicated region
    $region18: #{tpu_custom_call.1} parent=1 // pred_check
      %p20 = pneg %p19
    $region19: #{tpu_custom_call.1} parent=1 // pred_check_branch
      %22 = sbr.rel (%p20) target = $region21
    $region20: #{tpu_custom_call.1} parent=1 // pred_region
      %vm23 = vcmask 31744
      %24 = vst.msk [vmem:[#allocation2] sm:$0xff] %vm23, 0.0
      %25 = vst.msk [vmem:[#allocation2 + $0x8] sm:$0xff] %vm23, 0.0
    $region21: #{tpu_custom_call.1} parent=1 // pred_fallthru
      _
    %v26 = vld [vmem:[#allocation2] sm:$0xff]
    %v27 = vld [vmem:[#allocation2 + $0x8] sm:$0xff]
    %v28 = vld [vmem:[%s0] sm:$0xf]
    %v29 = vld [vmem:[%s0 + $0x4] sm:$0xf]
    %v30 = vld [vmem:[%s1] sm:$0xf]
    %v31 = vld [vmem:[%s1 + $0x4] sm:$0xf]
    %v34 = vunpack.c.l.b16 %v28
    %v35 = vunpack.c.l.b16 %v29
    %v36 = vpack.c.b16 %v35, %v34
    %v39 = vunpack.c.l.b16 %v30
    %v40 = vunpack.c.l.b16 %v31
    %v41 = vpack.c.b16 %v40, %v39
    %vm43 = vcmask 130048
    %v45 = vsel %vm43, %v36, 0
    %47 = vmatprep.subr.bf16.mxu0 0
    %48 = vmatpush1.bf16.msra.mxu0 0
    %49 = vmatprep.subr.bf16.mxu0 0
    %50 = vmatpush1.bf16.msra.mxu0 0
    %51 = vmatprep.subr.bf16.mxu0 0
    %52 = vmatpush1.bf16.msra.mxu0 0
    %53 = vmatprep.subr.bf16.mxu0 0
    %54 = vmatpush1.bf16.msra.mxu0 0
    %55 = vmatprep.subr.bf16.mxu0 0
    %56 = vmatpush1.bf16.msra.mxu0 0
    %57 = vmatprep.subr.bf16.mxu0 0
    %58 = vmatpush1.bf16.msra.mxu0 0
    %59 = vmatprep.subr.bf16.mxu0 0
    %60 = vmatpush1.bf16.msra.mxu0 0
    %61 = vmatprep.subr.bf16.mxu0 0
    %62 = vmatpush1.bf16.msra.mxu0 %v41
    %63 = vmatprep.subr.bf16.mxu0 0
    %64 = vmatpush2.bf16.msra.mxu0 0
    %65 = vmatprep.subr.bf16.mxu0 0
    %66 = vmatpush2.bf16.msra.mxu0 0
    %67 = vmatprep.subr.bf16.mxu0 0
    %68 = vmatpush2.bf16.msra.mxu0 0
    %69 = vmatprep.subr.bf16.mxu0 0
    %70 = vmatpush2.bf16.msra.mxu0 0
    %71 = vmatprep.subr.bf16.mxu0 0
    %72 = vmatpush2.bf16.msra.mxu0 0
    %73 = vmatprep.subr.bf16.mxu0 0
    %74 = vmatpush2.bf16.msra.mxu0 0
    %75 = vmatprep.subr.bf16.mxu0 0
    %76 = vmatpush2.bf16.msra.mxu0 0
    %77 = vmatprep.subr.bf16.mxu0 0
    %78 = vmatpush2.bf16.msra.mxu0 0
    %79 = vmatprep.mubr.bf16.mxu0 0
    %80 = vmatmul.mubr.bf16.gmra.mxu0 %v45
    %v81 = vpop.f32.mrf.mxu0
    %v82 = vadd.f32 0.0, %v81
    %v83 = vpop.f32.mrf.mxu0
    %v84 = vpop.f32.mrf.mxu0
    %v85 = vadd.f32 0.0, %v84
    %v86 = vpop.f32.mrf.mxu0
    %87 = vdwg.mxu0
    %v88 = vadd.f32 %v26, %v82
    %v89 = vadd.f32 %v27, %v85
    %vm90 = vcmask 31744
    %91 = vst.msk [vmem:[#allocation2] sm:$0xff] %vm90, %v88
    %92 = vst.msk [vmem:[#allocation2 + $0x8] sm:$0xff] %vm90, %v89
    // Predicated region
    $region22: #{tpu_custom_call.1} parent=1 // pred_check
      %p93 = pneg %p19
    $region23: #{tpu_custom_call.1} parent=1 // pred_check_branch
      %95 = sbr.rel (%p93) target = $region25
    $region24: #{tpu_custom_call.1} parent=1 // pred_region
      %v96 = vld [vmem:[#allocation2] sm:$0xff]
      %v97 = vld [vmem:[#allocation2 + $0x8] sm:$0xff]
      %v98 = vpack.c.bf16 %v97, %v96
      %v99 = vld [vmem:[%s2] sm:$0x3]
      %v100 = vld [vmem:[%s3] sm:$0x1]
      %v102 = vlaneseq
      %v103 = vshrl.u32 %v102, 7
      %v104 = vsub.s32 0, %v103
      %v105 = vrot.slane %v100, %v104
      %v108 = vsel %vm90, %v98, 0
      %vm110 = vcmask 1041408
      %v112 = vsel %vm110, %v99, 0
      %114 = vmatprep.subr.bf16.mxu0 0
      %115 = vmatpush1.bf16.msra.mxu0 0
      %116 = vmatprep.subr.bf16.mxu0 0
      %117 = vmatpush1.bf16.msra.mxu0 0
      %118 = vmatprep.subr.bf16.mxu0 0
      %119 = vmatpush1.bf16.msra.mxu0 0
      %120 = vmatprep.subr.bf16.mxu0 0
      %121 = vmatpush1.bf16.msra.mxu0 0
      %122 = vmatprep.subr.bf16.mxu0 0
      %123 = vmatpush1.bf16.msra.mxu0 0
      %124 = vmatprep.subr.bf16.mxu0 0
      %125 = vmatpush1.bf16.msra.mxu0 0
      %126 = vmatprep.subr.bf16.mxu0 0
      %127 = vmatpush1.bf16.msra.mxu0 0
      %128 = vmatprep.subr.bf16.mxu0 0
      %129 = vmatpush1.bf16.msra.mxu0 %v112
      %130 = vmatprep.subr.bf16.mxu0 0
      %131 = vmatpush2.bf16.msra.mxu0 0
      %132 = vmatprep.subr.bf16.mxu0 0
      %133 = vmatpush2.bf16.msra.mxu0 0
      %134 = vmatprep.subr.bf16.mxu0 0
      %135 = vmatpush2.bf16.msra.mxu0 0
      %136 = vmatprep.subr.bf16.mxu0 0
      %137 = vmatpush2.bf16.msra.mxu0 0
      %138 = vmatprep.subr.bf16.mxu0 0
      %139 = vmatpush2.bf16.msra.mxu0 0
      %140 = vmatprep.subr.bf16.mxu0 0
      %141 = vmatpush2.bf16.msra.mxu0 0
      %142 = vmatprep.subr.bf16.mxu0 0
      %143 = vmatpush2.bf16.msra.mxu0 0
      %144 = vmatprep.subr.bf16.mxu0 0
      %145 = vmatpush2.bf16.msra.mxu0 0
      %146 = vmatprep.mubr.bf16.mxu0 0
      %147 = vmatmul.mubr.bf16.gmra.mxu0 %v108
      %v148 = vpop.f32.mrf.mxu0
      %v149 = vadd.f32 %v105, %v148
      %v150 = vpop.f32.mrf.mxu0
      %v151 = vpop.f32.mrf.mxu0
      %v152 = vadd.f32 %v105, %v151
      %v153 = vpop.f32.mrf.mxu0
      %154 = vdwg.mxu0
      %v155 = vmax.f32 %v149, 0.0
      %v156 = vmax.f32 %v152, 0.0
      %v157 = vpack.c.bf16 %v156, %v155
      %v159 = vunpack.c.l.b16 %v157
      %v160 = vunpack.c.h.b16 %v157
      %v161 = vpack.c.b16 %v159, %v159
      %v162 = vpack.c.b16 %v160, %v160
      %vm165 = vcmask 257024
      %166 = vst.msk [vmem:[#allocation3] sm:$0xf] %vm165, %v161
      %167 = vst.msk [vmem:[#allocation3 + $0x4] sm:$0xf] %vm165, %v162
    $region25: #{tpu_custom_call.1} parent=1 // pred_fallthru
      _
    // Predicated region
    $region26: #{tpu_custom_call.1} parent=1 // pred_check
      _
    $region27: #{tpu_custom_call.1} parent=1 // pred_check_branch
      %169 = sbr.rel (0) target = $region29
    $region28: #{tpu_custom_call.1} parent=1 // pred_region
      %s171 = ssub.s32 128, 128
      %172 = vsyncadd [#allocation4], %s171
      %s173 = sshll.u32 [#allocation3], 4
      %s174 = int_to_ptr.vmem [resolvable:$true] %s173
      %179 = dma.vmem_to_hbm [thread:$0]  %s174, 128, %s4, [#allocation4], 64, 64, 4
    $region29: #{tpu_custom_call.1} parent=1 // pred_fallthru
      _
    // Predicated region
    $region30: #{tpu_custom_call.1} parent=1 // pred_check
      _
    $region31: #{tpu_custom_call.1} parent=1 // pred_check_branch
      %181 = sbr.rel (0) target = $region33
    $region32: #{tpu_custom_call.1} parent=1 // pred_region
      %182 = dma.done [#allocation4], 128
    $region33: #{tpu_custom_call.1} parent=1 // pred_fallthru
      _
    %183 = vsyncpa [#allocation4], 1

</llo_original>
